<compile_context>
chip_gen: v7x
topology: tpu7x:2x2x1
jax: 0.10.0
libtpu: 0.0.40
codegen_flags: <defaults>
</compile_context>

<pallas_src>
import functools

import jax
import jax.numpy as jnp
from jax.experimental import pallas as pl
from jax.experimental.pallas import tpu as pltpu


def _round_up(n, m):
    return ((n + m - 1) // m) * m


def _has_two_tensorcores():
    # v7x has 2 TensorCores per chip sharing the "parallel" grid axis; v5e/v6e
    # have 1. Best-effort detection; default to single-core behavior.
    try:
        kind = jax.devices()[0].device_kind.lower()
        return "v7" in kind
    except Exception:  # pragma: no cover
        return False


def _default_block_b(b_aligned):
    """b_aligned is the batch rounded up to a multiple of 16."""
    if _has_two_tensorcores() and b_aligned >= 512:
        # Exactly 2 (or a small multiple of 2) grid steps of >=256 rows each so
        # both TensorCores get a full-size tile.
        return min(512, _round_up(b_aligned // 2, 16))
    if b_aligned <= 1024:
        # Single-core: grid steps are a serial loop (~0.35 us each) while per
        # tile compute is ~0.1 us -> one big tile. VMEM use stays ~1-3 MB.
        return b_aligned
    return 512


def _dqn_kernel(x_ref, w1_ref, b1_ref, w2_ref, b2_ref, w3_ref, b3_ref,
                w4_ref, b4_ref, out_ref):
    # x arrives f32; cast to bf16 in-kernel (VPU work hidden under the MXU).
    # Weights are pre-cast bf16; accumulate, bias add and ReLU stay in f32.
    x = x_ref[...].astype(jnp.bfloat16)
    h = jnp.dot(x, w1_ref[...],
                preferred_element_type=jnp.float32) + b1_ref[...]
    h = jnp.maximum(h, 0.0).astype(jnp.bfloat16)
    h = jnp.dot(h, w2_ref[...],
                preferred_element_type=jnp.float32) + b2_ref[...]
    h = jnp.maximum(h, 0.0).astype(jnp.bfloat16)
    h = jnp.dot(h, w3_ref[...],
                preferred_element_type=jnp.float32) + b3_ref[...]
    h = jnp.maximum(h, 0.0).astype(jnp.bfloat16)
    out = jnp.dot(h, w4_ref[...],
                  preferred_element_type=jnp.float32) + b4_ref[...]
    out_ref[...] = out.astype(out_ref.dtype)


def prepare_params(params):
    """One-time prep: cast weights to bf16, pad the last layer to 128 lanes.

    Re-run only when params change (e.g. after a training step). Returns
    (prepped_dict, action_size).
    """
    w1, b1 = params["w1"], params["b1"]
    w2, b2 = params["w2"], params["b2"]
    w3, b3 = params["w3"], params["b3"]
    w4, b4 = params["w4"], params["b4"]
    H3, A = w4.shape
    A_pad = _round_up(max(A, 128), 128)

    prepped = {
        # First-layer K equals state_size (x is fed unpadded) -> no row padding.
        "w1": w1.astype(jnp.bfloat16),
        "w2": w2.astype(jnp.bfloat16),
        "w3": w3.astype(jnp.bfloat16),
        "w4": jnp.zeros((H3, A_pad), jnp.bfloat16).at[:, :A].set(
            w4.astype(jnp.bfloat16)),
        "b1": b1.reshape(1, -1).astype(jnp.float32),
        "b2": b2.reshape(1, -1).astype(jnp.float32),
        "b3": b3.reshape(1, -1).astype(jnp.float32),
        "b4": jnp.zeros((1, A_pad), jnp.float32).at[:, :A].set(
            b4.reshape(1, -1).astype(jnp.float32)),
    }
    return prepped, int(A)


@functools.partial(jax.jit, static_argnames=("block_b", "out_dtype"))
def dqn_forward_padded(x, prepped, block_b=None, out_dtype=jnp.float32):
    """Returns the lane-dense padded output (B_pad, A_pad=128).

    Useful when the consumer (e.g. argmax over actions) can be applied to the
    padded buffer, avoiding a separate slice kernel after the Pallas call.
    """
    B, S = x.shape
    A_pad = prepped["w4"].shape[1]

    # Pad batch to a multiple of 16 (bf16 sublane packing) and of the tile.
    B16 = _round_up(max(B, 16), 16)
    bb = _default_block_b(B16) if block_b is None else block_b
    B_pad = _round_up(B16, bb)
    if B_pad != B:
        x = jnp.pad(x, ((0, B_pad - B), (0, 0)))

    grid = (B_pad // bb,)

    def resident(shape):
        # Grid-invariant operand: constant index_map + single-buffered so it is
        # DMA'd once and stays resident in VMEM for all grid steps.
        return pl.BlockSpec(shape, lambda i: (0,) * len(shape),
                            pipeline_mode=pl.Buffered(1))

    return pl.pallas_call(
        _dqn_kernel,
        out_shape=jax.ShapeDtypeStruct((B_pad, A_pad), out_dtype),
        grid_spec=pltpu.PrefetchScalarGridSpec(
            num_scalar_prefetch=0,
            grid=grid,
            in_specs=[
                # x batch tile: last dim == full array dim, so no 128-padding.
                pl.BlockSpec((bb, S), lambda i: (i, 0)),
                resident(prepped["w1"].shape), resident(prepped["b1"].shape),
                resident(prepped["w2"].shape), resident(prepped["b2"].shape),
                resident(prepped["w3"].shape), resident(prepped["b3"].shape),
                resident(prepped["w4"].shape), resident(prepped["b4"].shape),
            ],
            out_specs=pl.BlockSpec((bb, A_pad), lambda i: (i, 0)),
        ),
        compiler_params=pltpu.CompilerParams(
            dimension_semantics=("parallel",)),
    )(x, prepped["w1"], prepped["b1"], prepped["w2"], prepped["b2"],
      prepped["w3"], prepped["b3"], prepped["w4"], prepped["b4"])


@functools.partial(jax.jit,
                   static_argnames=("action_size", "block_b", "out_dtype"))
def dqn_forward(x, prepped, action_size, block_b=None, out_dtype=jnp.float32):
    """Exact DQNModel.forward semantics: (B, state_size) -> (B, action_size)."""
    out_padded = dqn_forward_padded(x, prepped, block_b=block_b,
                                    out_dtype=out_dtype)
    return out_padded[:x.shape[0], :action_size]


def init_params(key, state_size, action_size):
    """Deterministic init mimicking PyTorch nn.Linear default:
    U(-1/sqrt(fan_in), 1/sqrt(fan_in)) for both weight and bias."""
    dims = [(state_size, 256), (256, 256), (256, 128), (128, action_size)]
    params = {}
    keys = jax.random.split(key, 2 * len(dims))
    for idx, (fan_in, fan_out) in enumerate(dims):
        bound = 1.0 / jnp.sqrt(jnp.float32(fan_in))
        w = jax.random.uniform(keys[2 * idx], (fan_in, fan_out),
                               minval=-bound, maxval=bound, dtype=jnp.float32)
        b = jax.random.uniform(keys[2 * idx + 1], (1, fan_out),
                               minval=-bound, maxval=bound, dtype=jnp.float32)
        params[f"w{idx + 1}"] = w
        params[f"b{idx + 1}"] = b
    return params


def dqn_forward_ref(x, params):
    h = jnp.maximum(x @ params["w1"] + params["b1"], 0.0)
    h = jnp.maximum(h @ params["w2"] + params["b2"], 0.0)
    h = jnp.maximum(h @ params["w3"] + params["b3"], 0.0)
    return h @ params["w4"] + params["b4"]


if __name__ == "__main__":
    key = jax.random.PRNGKey(0)
    k_param, k_x, k_x2 = jax.random.split(key, 3)

    batch = 8
    state_size = 16
    action_size = 4

    params = init_params(k_param, state_size, action_size)
    # One-time weight prep (padded + bf16); reuse across all forward calls.
    prepped, a_size = prepare_params(params)

    # Small-batch check (single tile).
    x = jax.random.normal(k_x, (batch, state_size), dtype=jnp.float32)
    q_values = jax.block_until_ready(dqn_forward(x, prepped, a_size))
    q_ref = dqn_forward_ref(x, params)
    assert q_values.shape == (batch, action_size)
    assert jnp.allclose(q_values, q_ref, atol=3e-2, rtol=3e-2), \
        "mismatch vs reference (small batch)"

    # Multi-tile check: force block_b=128 so grid > 1 and the resident-weight
    # (single-buffered) path is exercised across grid steps.
    big_batch = 384
    x2 = jax.random.normal(k_x2, (big_batch, state_size), dtype=jnp.float32)
    q2 = jax.block_until_ready(dqn_forward(x2, prepped, a_size, block_b=128))
    q2_ref = dqn_forward_ref(x2, params)
    assert q2.shape == (big_batch, action_size)
    assert jnp.allclose(q2, q2_ref, atol=3e-2, rtol=3e-2), \
        "mismatch vs reference (large batch, multi-tile)"

    # Default auto tile choice on the large batch (single tile on v5e/v6e,
    # split tiles on v7x) — also exercises the padded-output path.
    q3 = jax.block_until_ready(dqn_forward_padded(x2, prepped))
    assert q3.shape[1] == 128 and q3.shape[0] >= big_batch
    assert jnp.allclose(q3[:big_batch, :action_size], q2_ref,
                        atol=3e-2, rtol=3e-2), \
        "mismatch vs reference (padded output)"

    print("KERNEL_OK")
</pallas_src>

<mosaic_0001>
module attributes {stable_mosaic.version = 11 : i64} {
  func.func @_dqn_kernel(%arg0: i32, %arg1: memref<16x16xf32, #tpu.memory_space<vmem>>, %arg2: memref<16x256xbf16, #tpu.memory_space<vmem>>, %arg3: memref<1x256xf32, #tpu.memory_space<vmem>>, %arg4: memref<256x256xbf16, #tpu.memory_space<vmem>>, %arg5: memref<1x256xf32, #tpu.memory_space<vmem>>, %arg6: memref<256x128xbf16, #tpu.memory_space<vmem>>, %arg7: memref<1x128xf32, #tpu.memory_space<vmem>>, %arg8: memref<128x128xbf16, #tpu.memory_space<vmem>>, %arg9: memref<1x128xf32, #tpu.memory_space<vmem>>, %arg10: memref<16x128xf32, #tpu.memory_space<vmem>>) attributes {dimension_semantics = [#tpu.dimension_semantics<parallel>], iteration_bounds = array<i64: 1>, scalar_prefetch = 0 : i64, scratch_operands = 0 : i64, tpu.core_type = #tpu.core_type<tc>, window_params = [{transform_indices = @transform_0, window_bounds = array<i64: 16, 16>}, {pipeline_mode = #tpu.pipeline_mode<synchronous>, transform_indices = @transform_1, window_bounds = array<i64: 16, 256>}, {pipeline_mode = #tpu.pipeline_mode<synchronous>, transform_indices = @transform_2, window_bounds = array<i64: 1, 256>}, {pipeline_mode = #tpu.pipeline_mode<synchronous>, transform_indices = @transform_3, window_bounds = array<i64: 256, 256>}, {pipeline_mode = #tpu.pipeline_mode<synchronous>, transform_indices = @transform_4, window_bounds = array<i64: 1, 256>}, {pipeline_mode = #tpu.pipeline_mode<synchronous>, transform_indices = @transform_5, window_bounds = array<i64: 256, 128>}, {pipeline_mode = #tpu.pipeline_mode<synchronous>, transform_indices = @transform_6, window_bounds = array<i64: 1, 128>}, {pipeline_mode = #tpu.pipeline_mode<synchronous>, transform_indices = @transform_7, window_bounds = array<i64: 128, 128>}, {pipeline_mode = #tpu.pipeline_mode<synchronous>, transform_indices = @transform_8, window_bounds = array<i64: 1, 128>}, {transform_indices = @transform_9, window_bounds = array<i64: 16, 128>}]} {
    %c0 = arith.constant 0 : index
    %c0_0 = arith.constant 0 : index
    %0 = vector.load %arg1[%c0, %c0_0] : memref<16x16xf32, #tpu.memory_space<vmem>>, vector<16x16xf32>
    %1 = arith.truncf %0 : vector<16x16xf32> to vector<16x16xbf16>
    %c0_1 = arith.constant 0 : index
    %c0_2 = arith.constant 0 : index
    %2 = vector.load %arg2[%c0_1, %c0_2] : memref<16x256xbf16, #tpu.memory_space<vmem>>, vector<16x256xbf16>
    %cst = arith.constant dense<0.000000e+00> : vector<16x256xf32>
    %3 = tpu.matmul %1, %2, %cst {dimension_numbers = #tpu.dot_dimension_numbers<[1], [0], [0], [1], [0, 0, 1, 1], [], []>} : vector<16x16xbf16>, vector<16x256xbf16>, vector<16x256xf32> -> vector<16x256xf32>
    %c0_3 = arith.constant 0 : index
    %c0_4 = arith.constant 0 : index
    %4 = vector.load %arg3[%c0_3, %c0_4] : memref<1x256xf32, #tpu.memory_space<vmem>>, vector<1x256xf32>
    %5 = vector.broadcast %4 : vector<1x256xf32> to vector<16x256xf32>
    %6 = arith.addf %3, %5 : vector<16x256xf32>
    %cst_5 = arith.constant 0.000000e+00 : f32
    %7 = vector.broadcast %cst_5 : f32 to vector<16x256xf32>
    %8 = arith.maximumf %6, %7 : vector<16x256xf32>
    %9 = arith.truncf %8 : vector<16x256xf32> to vector<16x256xbf16>
    %c0_6 = arith.constant 0 : index
    %c0_7 = arith.constant 0 : index
    %10 = vector.load %arg4[%c0_6, %c0_7] : memref<256x256xbf16, #tpu.memory_space<vmem>>, vector<256x256xbf16>
    %cst_8 = arith.constant dense<0.000000e+00> : vector<16x256xf32>
    %11 = tpu.matmul %9, %10, %cst_8 {dimension_numbers = #tpu.dot_dimension_numbers<[1], [0], [0], [1], [0, 0, 1, 1], [], []>} : vector<16x256xbf16>, vector<256x256xbf16>, vector<16x256xf32> -> vector<16x256xf32>
    %c0_9 = arith.constant 0 : index
    %c0_10 = arith.constant 0 : index
    %12 = vector.load %arg5[%c0_9, %c0_10] : memref<1x256xf32, #tpu.memory_space<vmem>>, vector<1x256xf32>
    %13 = vector.broadcast %12 : vector<1x256xf32> to vector<16x256xf32>
    %14 = arith.addf %11, %13 : vector<16x256xf32>
    %cst_11 = arith.constant 0.000000e+00 : f32
    %15 = vector.broadcast %cst_11 : f32 to vector<16x256xf32>
    %16 = arith.maximumf %14, %15 : vector<16x256xf32>
    %17 = arith.truncf %16 : vector<16x256xf32> to vector<16x256xbf16>
    %c0_12 = arith.constant 0 : index
    %c0_13 = arith.constant 0 : index
    %18 = vector.load %arg6[%c0_12, %c0_13] : memref<256x128xbf16, #tpu.memory_space<vmem>>, vector<256x128xbf16>
    %cst_14 = arith.constant dense<0.000000e+00> : vector<16x128xf32>
    %19 = tpu.matmul %17, %18, %cst_14 {dimension_numbers = #tpu.dot_dimension_numbers<[1], [0], [0], [1], [0, 0, 1, 1], [], []>} : vector<16x256xbf16>, vector<256x128xbf16>, vector<16x128xf32> -> vector<16x128xf32>
    %c0_15 = arith.constant 0 : index
    %c0_16 = arith.constant 0 : index
    %20 = vector.load %arg7[%c0_15, %c0_16] : memref<1x128xf32, #tpu.memory_space<vmem>>, vector<1x128xf32>
    %21 = vector.broadcast %20 : vector<1x128xf32> to vector<16x128xf32>
    %22 = arith.addf %19, %21 : vector<16x128xf32>
    %cst_17 = arith.constant 0.000000e+00 : f32
    %23 = vector.broadcast %cst_17 : f32 to vector<16x128xf32>
    %24 = arith.maximumf %22, %23 : vector<16x128xf32>
    %25 = arith.truncf %24 : vector<16x128xf32> to vector<16x128xbf16>
    %c0_18 = arith.constant 0 : index
    %c0_19 = arith.constant 0 : index
    %26 = vector.load %arg8[%c0_18, %c0_19] : memref<128x128xbf16, #tpu.memory_space<vmem>>, vector<128x128xbf16>
    %cst_20 = arith.constant dense<0.000000e+00> : vector<16x128xf32>
    %27 = tpu.matmul %25, %26, %cst_20 {dimension_numbers = #tpu.dot_dimension_numbers<[1], [0], [0], [1], [0, 0, 1, 1], [], []>} : vector<16x128xbf16>, vector<128x128xbf16>, vector<16x128xf32> -> vector<16x128xf32>
    %c0_21 = arith.constant 0 : index
    %c0_22 = arith.constant 0 : index
    %28 = vector.load %arg9[%c0_21, %c0_22] : memref<1x128xf32, #tpu.memory_space<vmem>>, vector<1x128xf32>
    %29 = vector.broadcast %28 : vector<1x128xf32> to vector<16x128xf32>
    %30 = arith.addf %27, %29 : vector<16x128xf32>
    %c0_23 = arith.constant 0 : index
    %c0_24 = arith.constant 0 : index
    %31 = vector.load %arg10[%c0_23, %c0_24] : memref<16x128xf32, #tpu.memory_space<vmem>>, vector<16x128xf32>
    tpu.vector_store %arg10[%c0_23, %c0_24], %30 {strides = array<i32>} : memref<16x128xf32, #tpu.memory_space<vmem>>, vector<16x128xf32>,
    return
  }
  func.func @transform_0(%arg0: i32) -> (i32, i32) {
    %c0_i32 = arith.constant 0 : i32
    %c0_i32_0 = arith.constant 0 : i32
    return %arg0, %c0_i32 : i32, i32
  }
  func.func @transform_1(%arg0: i32) -> (i32, i32) {
    %c0_i32 = arith.constant 0 : i32
    %c0_i32_0 = arith.constant 0 : i32
    %c0_i32_1 = arith.constant 0 : i32
    return %c0_i32, %c0_i32_0 : i32, i32
  }
  func.func @transform_2(%arg0: i32) -> (i32, i32) {
    %c0_i32 = arith.constant 0 : i32
    %c0_i32_0 = arith.constant 0 : i32
    %c0_i32_1 = arith.constant 0 : i32
    return %c0_i32, %c0_i32_0 : i32, i32
  }
  func.func @transform_3(%arg0: i32) -> (i32, i32) {
    %c0_i32 = arith.constant 0 : i32
    %c0_i32_0 = arith.constant 0 : i32
    %c0_i32_1 = arith.constant 0 : i32
    return %c0_i32, %c0_i32_0 : i32, i32
  }
  func.func @transform_4(%arg0: i32) -> (i32, i32) {
    %c0_i32 = arith.constant 0 : i32
    %c0_i32_0 = arith.constant 0 : i32
    %c0_i32_1 = arith.constant 0 : i32
    return %c0_i32, %c0_i32_0 : i32, i32
  }
  func.func @transform_5(%arg0: i32) -> (i32, i32) {
    %c0_i32 = arith.constant 0 : i32
    %c0_i32_0 = arith.constant 0 : i32
    %c0_i32_1 = arith.constant 0 : i32
    return %c0_i32, %c0_i32_0 : i32, i32
  }
  func.func @transform_6(%arg0: i32) -> (i32, i32) {
    %c0_i32 = arith.constant 0 : i32
    %c0_i32_0 = arith.constant 0 : i32
    %c0_i32_1 = arith.constant 0 : i32
    return %c0_i32, %c0_i32_0 : i32, i32
  }
  func.func @transform_7(%arg0: i32) -> (i32, i32) {
    %c0_i32 = arith.constant 0 : i32
    %c0_i32_0 = arith.constant 0 : i32
    %c0_i32_1 = arith.constant 0 : i32
    return %c0_i32, %c0_i32_0 : i32, i32
  }
  func.func @transform_8(%arg0: i32) -> (i32, i32) {
    %c0_i32 = arith.constant 0 : i32
    %c0_i32_0 = arith.constant 0 : i32
    %c0_i32_1 = arith.constant 0 : i32
    return %c0_i32, %c0_i32_0 : i32, i32
  }
  func.func @transform_9(%arg0: i32) -> (i32, i32) {
    %c0_i32 = arith.constant 0 : i32
    %c0_i32_0 = arith.constant 0 : i32
    return %arg0, %c0_i32 : i32, i32
  }
}

</mosaic_0001>

<llo_original>
// kernel: dqn_forward_padded.1
$region0: #{dqn_forward_padded.1}
  #allocation0 [shape = 'u32[]', space=smem, size = 0x4, offset = 0x4, fixed_abs, tag = 'smem constant byte address 0x4 - core index']
  #allocation1 [shape = 'u32[144,128]{1,0:T(1,128)}', space=vmem, size = 0x12000, scoped, tag = 'internal scratch']
  %s0 = inlined_call_operand.vmem [shape: f32[16,16], index: 0, kind: input, shape index: {}]
  %s1 = inlined_call_operand.vmem [shape: bf16[16,256], index: 1, kind: input, shape index: {}]
  %s2 = inlined_call_operand.vmem [shape: f32[1,256], index: 2, kind: input, shape index: {}]
  %s3 = inlined_call_operand.hbm [shape: bf16[256,256], index: 3, kind: input, shape index: {}]
  %s4 = inlined_call_operand.vmem [shape: f32[1,256], index: 4, kind: input, shape index: {}]
  %s5 = inlined_call_operand.hbm [shape: bf16[256,128], index: 5, kind: input, shape index: {}]
  %s6 = inlined_call_operand.vmem [shape: f32[1,128], index: 6, kind: input, shape index: {}]
  %s7 = inlined_call_operand.hbm [shape: bf16[128,128], index: 7, kind: input, shape index: {}]
  %s8 = inlined_call_operand.vmem [shape: f32[1,128], index: 8, kind: input, shape index: {}]
  %s9 = inlined_call_operand.hbm [shape: f32[16,128], index: 9, kind: output, shape index: {}]
  %s10 = sld [smem:[#allocation0]]
  $region58: #{dqn_forward_padded.1} parent=0
    _
  %s12 = ssub.s32 1, %s10
  %s13 = scalar_select 0, %s12, %s10
  $region1: #{dqn_forward_padded.1} parent=0
    #allocation2 [shape = 'u8[131072]{0}', space=vmem, size = 0x20000, scoped, tag = 'input window, operand 3, single buffered']
    #allocation3 [shape = 's32[1]{0}', space=sflag, size = 0x4, scoped, tag = 'scoped memory for dqn_forward_padded.1']
    #allocation4 [shape = 's32[1]{0}', space=sflag, size = 0x4, scoped, tag = 'scoped memory for dqn_forward_padded.1']
    #allocation5 [shape = 'u8[65536]{0}', space=vmem, size = 0x10000, scoped, tag = 'input window, operand 5, single buffered']
    #allocation6 [shape = 's32[1]{0}', space=sflag, size = 0x4, scoped, tag = 'scoped memory for dqn_forward_padded.1']
    #allocation7 [shape = 'u8[32768]{0}', space=vmem, size = 0x8000, scoped, tag = 'input window, operand 7, single buffered']
    #allocation8 [shape = 'u8[8192]{0}', space=vmem, size = 0x2000, scoped, tag = 'output window, operand 0, single buffered']
    %14 = vsyncpa [#allocation3], 0
    %15 = vsyncpa [#allocation6], 0
    %16 = vsyncpa [#allocation4], 0
    // Predicated region
    $region2: #{dqn_forward_padded.1} parent=1 // pred_check
      _
    $region3: #{dqn_forward_padded.1} parent=1 // pred_check_branch
      %18 = sbr.rel (0) target = $region5
    $region4: #{dqn_forward_padded.1} parent=1 // pred_region
      _
    $region5: #{dqn_forward_padded.1} parent=1 // pred_fallthru
      _
    // Predicated region
    $region6: #{dqn_forward_padded.1} parent=1 // pred_check
      _
    $region7: #{dqn_forward_padded.1} parent=1 // pred_check_branch
      %20 = sbr.rel (0) target = $region9
    $region8: #{dqn_forward_padded.1} parent=1 // pred_region
      _
    $region9: #{dqn_forward_padded.1} parent=1 // pred_fallthru
      _
    // Predicated region
    $region10: #{dqn_forward_padded.1} parent=1 // pred_check
      _
    $region11: #{dqn_forward_padded.1} parent=1 // pred_check_branch
      %22 = sbr.rel (0) target = $region13
    $region12: #{dqn_forward_padded.1} parent=1 // pred_region
      _
    $region13: #{dqn_forward_padded.1} parent=1 // pred_fallthru
      _
    // Predicated region
    $region14: #{dqn_forward_padded.1} parent=1 // pred_check
      _
    $region15: #{dqn_forward_padded.1} parent=1 // pred_check_branch
      %24 = sbr.rel (0) target = $region17
    $region16: #{dqn_forward_padded.1} parent=1 // pred_region
      %s26 = ssub.s32 4096, 4096
      %27 = vsyncadd [#allocation3], %s26
      %s28 = sshll.u32 [#allocation2], 4
      %s29 = int_to_ptr.vmem [resolvable:$true] %s28
      %34 = dma.hbm_to_vmem [thread:$0]  %s3, 4096, %s29, [#allocation3], 128, 128, 8
    $region17: #{dqn_forward_padded.1} parent=1 // pred_fallthru
      _
    // Predicated region
    $region18: #{dqn_forward_padded.1} parent=1 // pred_check
      _
    $region19: #{dqn_forward_padded.1} parent=1 // pred_check_branch
      %36 = sbr.rel (0) target = $region21
    $region20: #{dqn_forward_padded.1} parent=1 // pred_region
      _
    $region21: #{dqn_forward_padded.1} parent=1 // pred_fallthru
      _
    // Predicated region
    $region22: #{dqn_forward_padded.1} parent=1 // pred_check
      _
    $region23: #{dqn_forward_padded.1} parent=1 // pred_check_branch
      %38 = sbr.rel (0) target = $region25
    $region24: #{dqn_forward_padded.1} parent=1 // pred_region
      %s40 = ssub.s32 2048, 2048
      %41 = vsyncadd [#allocation6], %s40
      %s42 = sshll.u32 [#allocation5], 4
      %s43 = int_to_ptr.vmem [resolvable:$true] %s42
      %48 = dma.hbm_to_vmem [thread:$0]  %s5, 2048, %s43, [#allocation6], 64, 64, 4
    $region25: #{dqn_forward_padded.1} parent=1 // pred_fallthru
      _
    // Predicated region
    $region26: #{dqn_forward_padded.1} parent=1 // pred_check
      _
    $region27: #{dqn_forward_padded.1} parent=1 // pred_check_branch
      %50 = sbr.rel (0) target = $region29
    $region28: #{dqn_forward_padded.1} parent=1 // pred_region
      _
    $region29: #{dqn_forward_padded.1} parent=1 // pred_fallthru
      _
    // Predicated region
    $region30: #{dqn_forward_padded.1} parent=1 // pred_check
      _
    $region31: #{dqn_forward_padded.1} parent=1 // pred_check_branch
      %52 = sbr.rel (0) target = $region33
    $region32: #{dqn_forward_padded.1} parent=1 // pred_region
      %s54 = ssub.s32 1024, 1024
      %55 = vsyncadd [#allocation6], %s54
      %s56 = sshll.u32 [#allocation7], 4
      %s57 = int_to_ptr.vmem [resolvable:$true] %s56
      %62 = dma.hbm_to_vmem [thread:$0]  %s7, 1024, %s57, [#allocation6], 64, 64, 4
    $region33: #{dqn_forward_padded.1} parent=1 // pred_fallthru
      _
    // Predicated region
    $region34: #{dqn_forward_padded.1} parent=1 // pred_check
      _
    $region35: #{dqn_forward_padded.1} parent=1 // pred_check_branch
      %64 = sbr.rel (0) target = $region37
    $region36: #{dqn_forward_padded.1} parent=1 // pred_region
      _
    $region37: #{dqn_forward_padded.1} parent=1 // pred_fallthru
      _
    // Predicated region
    $region38: #{dqn_forward_padded.1} parent=1 // pred_check
      _
    $region39: #{dqn_forward_padded.1} parent=1 // pred_check_branch
      %66 = sbr.rel (0) target = $region41
    $region40: #{dqn_forward_padded.1} parent=1 // pred_region
      %67 = dma.done [#allocation3], 4096
    $region41: #{dqn_forward_padded.1} parent=1 // pred_fallthru
      _
    // Predicated region
    $region42: #{dqn_forward_padded.1} parent=1 // pred_check
      _
    $region43: #{dqn_forward_padded.1} parent=1 // pred_check_branch
      %69 = sbr.rel (0) target = $region45
    $region44: #{dqn_forward_padded.1} parent=1 // pred_region
      %70 = dma.done [#allocation6], 2048
    $region45: #{dqn_forward_padded.1} parent=1 // pred_fallthru
      _
    // Predicated region
    $region46: #{dqn_forward_padded.1} parent=1 // pred_check
      _
    $region47: #{dqn_forward_padded.1} parent=1 // pred_check_branch
      %72 = sbr.rel (0) target = $region49
    $region48: #{dqn_forward_padded.1} parent=1 // pred_region
      %73 = dma.done [#allocation6], 1024
    $region49: #{dqn_forward_padded.1} parent=1 // pred_fallthru
      _
    %v75 = vld [vmem:[%s0] sm:$0xff]
    %v76 = vld [vmem:[%s0 + $0x8] sm:$0xff]
    %v77 = vpack.c.bf16 %v76, %v75
    %v78 = vld [vmem:[%s1] sm:$0xff]
    %v79 = vld [vmem:[%s1 + $0x8] sm:$0xff]
    %v80 = vld [vmem:[%s2] sm:$0x3]
    %v82 = vlaneseq
    %v83 = vshrl.u32 %v82, 7
    %v84 = vsub.s32 0, %v83
    %v85 = vrot.slane %v80, %v84
    %v86 = vlaneseq
    %v87 = vshrl.u32 %v86, 7
    %v88 = vsub.s32 1, %v87
    %v89 = vrot.slane %v80, %v88
    %v94 = vunpack.c.l.b16 %v78
    %v95 = vunpack.c.h.b16 %v78
    %v96 = vunpack.c.l.b16 %v79
    %v97 = vunpack.c.h.b16 %v79
    %v98 = vpack.c.b16 %v96, %v94
    %v99 = vpack.c.b16 %v97, %v95
    %vm102 = vcmask 130048
    %v104 = vsel %vm102, %v77, 0
    %106 = vmatprep.subr.bf16.mxu0 %v99
    %107 = vmatpush1.bf16.msra.mxu0 %v98
    %108 = vmatprep.subr.bf16.mxu0 0
    %109 = vmatpush1.bf16.msra.mxu0 0
    %110 = vmatprep.subr.bf16.mxu0 0
    %111 = vmatpush1.bf16.msra.mxu0 0
    %112 = vmatprep.subr.bf16.mxu0 0
    %113 = vmatpush1.bf16.msra.mxu0 0
    %114 = vmatprep.subr.bf16.mxu0 0
    %115 = vmatpush1.bf16.msra.mxu0 0
    %116 = vmatprep.subr.bf16.mxu0 0
    %117 = vmatpush1.bf16.msra.mxu0 0
    %118 = vmatprep.subr.bf16.mxu0 0
    %119 = vmatpush1.bf16.msra.mxu0 0
    %120 = vmatprep.subr.bf16.mxu0 0
    %121 = vmatpush1.bf16.msra.mxu0 0
    %122 = vmatprep.subr.bf16.mxu0 0
    %123 = vmatpush1.bf16.msra.mxu0 0
    %124 = vmatprep.subr.bf16.mxu0 0
    %125 = vmatpush1.bf16.msra.mxu0 0
    %126 = vmatprep.subr.bf16.mxu0 0
    %127 = vmatpush1.bf16.msra.mxu0 0
    %128 = vmatprep.subr.bf16.mxu0 0
    %129 = vmatpush1.bf16.msra.mxu0 0
    %130 = vmatprep.subr.bf16.mxu0 0
    %131 = vmatpush1.bf16.msra.mxu0 0
    %132 = vmatprep.subr.bf16.mxu0 0
    %133 = vmatpush1.bf16.msra.mxu0 0
    %134 = vmatprep.subr.bf16.mxu0 0
    %135 = vmatpush1.bf16.msra.mxu0 0
    %136 = vmatprep.subr.bf16.mxu0 0
    %137 = vmatpush1.bf16.msra.mxu0 0
    %138 = vmatprep.mubr.bf16.mxu0 0
    %139 = vmatmul.mubr.bf16.gmra.mrb[0].mxu0 %v104
    %v140 = vpop.f32.mrb[0].mxu0
    %v141 = vadd.f32 %v85, %v140
    %v142 = vpop.f32.mrb[0].mxu0
    %v143 = vadd.f32 %v89, %v142
    %v144 = vpop.f32.mrb[0].mxu0
    %v145 = vadd.f32 %v85, %v144
    %v146 = vpop.f32.mrb[0].mxu0
    %v147 = vadd.f32 %v89, %v146
    %148 = vdwg.mxu0
    %v149 = vmax.f32 %v141, 0.0
    %v150 = vmax.f32 %v143, 0.0
    %v151 = vmax.f32 %v145, 0.0
    %v152 = vmax.f32 %v147, 0.0
    %v153 = vpack.c.bf16 %v151, %v149
    %v154 = vpack.c.bf16 %v152, %v150
    %v155 = vld [vmem:[#allocation2] sm:$0xff]
    %v156 = vld [vmem:[#allocation2 + $0x8] sm:$0xff]
    %v157 = vld [vmem:[#allocation2 + $0x10] sm:$0xff]
    %v158 = vld [vmem:[#allocation2 + $0x18] sm:$0xff]
    %v159 = vld [vmem:[#allocation2 + $0x20] sm:$0xff]
    %v160 = vld [vmem:[#allocation2 + $0x28] sm:$0xff]
    %v161 = vld [vmem:[#allocation2 + $0x30] sm:$0xff]
    %v162 = vld [vmem:[#allocation2 + $0x38] sm:$0xff]
    %v163 = vld [vmem:[#allocation2 + $0x40] sm:$0xff]
    %v164 = vld [vmem:[#allocation2 + $0x48] sm:$0xff]
    %v165 = vld [vmem:[#allocation2 + $0x50] sm:$0xff]
    %v166 = vld [vmem:[#allocation2 + $0x58] sm:$0xff]
    %v167 = vld [vmem:[#allocation2 + $0x60] sm:$0xff]
    %v168 = vld [vmem:[#allocation2 + $0x68] sm:$0xff]
    %v169 = vld [vmem:[#allocation2 + $0x70] sm:$0xff]
    %v170 = vld [vmem:[#allocation2 + $0x78] sm:$0xff]
    %v171 = vld [vmem:[#allocation2 + $0x80] sm:$0xff]
    %v172 = vld [vmem:[#allocation2 + $0x88] sm:$0xff]
    %v173 = vld [vmem:[#allocation2 + $0x90] sm:$0xff]
    %v174 = vld [vmem:[#allocation2 + $0x98] sm:$0xff]
    %v175 = vld [vmem:[#allocation2 + $0xa0] sm:$0xff]
    %v176 = vld [vmem:[#allocation2 + $0xa8] sm:$0xff]
    %v177 = vld [vmem:[#allocation2 + $0xb0] sm:$0xff]
    %v178 = vld [vmem:[#allocation2 + $0xb8] sm:$0xff]
    %v179 = vld [vmem:[#allocation2 + $0xc0] sm:$0xff]
    %v180 = vld [vmem:[#allocation2 + $0xc8] sm:$0xff]
    %v181 = vld [vmem:[#allocation2 + $0xd0] sm:$0xff]
    %v182 = vld [vmem:[#allocation2 + $0xd8] sm:$0xff]
    %v183 = vld [vmem:[#allocation2 + $0xe0] sm:$0xff]
    %v184 = vld [vmem:[#allocation2 + $0xe8] sm:$0xff]
    %v185 = vld [vmem:[#allocation2 + $0xf0] sm:$0xff]
    %v186 = vld [vmem:[#allocation2 + $0xf8] sm:$0xff]
    %v187 = vld [vmem:[%s4] sm:$0x3]
    %v189 = vlaneseq
    %v190 = vshrl.u32 %v189, 7
    %v191 = vsub.s32 0, %v190
    %v192 = vrot.slane %v187, %v191
    %v193 = vlaneseq
    %v194 = vshrl.u32 %v193, 7
    %v195 = vsub.s32 1, %v194
    %v196 = vrot.slane %v187, %v195
    %v231 = vunpack.c.l.b16 %v155
    %v232 = vunpack.c.h.b16 %v155
    %v233 = vunpack.c.l.b16 %v156
    %v234 = vunpack.c.h.b16 %v156
    %v235 = vunpack.c.l.b16 %v157
    %v236 = vunpack.c.h.b16 %v157
    %v237 = vunpack.c.l.b16 %v158
    %v238 = vunpack.c.h.b16 %v158
    %v239 = vunpack.c.l.b16 %v159
    %v240 = vunpack.c.h.b16 %v159
    %v241 = vunpack.c.l.b16 %v160
    %v242 = vunpack.c.h.b16 %v160
    %v243 = vunpack.c.l.b16 %v161
    %v244 = vunpack.c.h.b16 %v161
    %v245 = vunpack.c.l.b16 %v162
    %v246 = vunpack.c.h.b16 %v162
    %v247 = vunpack.c.l.b16 %v163
    %v248 = vunpack.c.h.b16 %v163
    %v249 = vunpack.c.l.b16 %v164
    %v250 = vunpack.c.h.b16 %v164
    %v251 = vunpack.c.l.b16 %v165
    %v252 = vunpack.c.h.b16 %v165
    %v253 = vunpack.c.l.b16 %v166
    %v254 = vunpack.c.h.b16 %v166
    %v255 = vunpack.c.l.b16 %v167
    %v256 = vunpack.c.h.b16 %v167
    %v257 = vunpack.c.l.b16 %v168
    %v258 = vunpack.c.h.b16 %v168
    %v259 = vunpack.c.l.b16 %v169
    %v260 = vunpack.c.h.b16 %v169
    %v261 = vunpack.c.l.b16 %v170
    %v262 = vunpack.c.h.b16 %v170
    %v263 = vunpack.c.l.b16 %v171
    %v264 = vunpack.c.h.b16 %v171
    %v265 = vunpack.c.l.b16 %v172
    %v266 = vunpack.c.h.b16 %v172
    %v267 = vunpack.c.l.b16 %v173
    %v268 = vunpack.c.h.b16 %v173
    %v269 = vunpack.c.l.b16 %v174
    %v270 = vunpack.c.h.b16 %v174
    %v271 = vunpack.c.l.b16 %v175
    %v272 = vunpack.c.h.b16 %v175
    %v273 = vunpack.c.l.b16 %v176
    %v274 = vunpack.c.h.b16 %v176
    %v275 = vunpack.c.l.b16 %v177
    %v276 = vunpack.c.h.b16 %v177
    %v277 = vunpack.c.l.b16 %v178
    %v278 = vunpack.c.h.b16 %v178
    %v279 = vunpack.c.l.b16 %v179
    %v280 = vunpack.c.h.b16 %v179
    %v281 = vunpack.c.l.b16 %v180
    %v282 = vunpack.c.h.b16 %v180
    %v283 = vunpack.c.l.b16 %v181
    %v284 = vunpack.c.h.b16 %v181
    %v285 = vunpack.c.l.b16 %v182
    %v286 = vunpack.c.h.b16 %v182
    %v287 = vunpack.c.l.b16 %v183
    %v288 = vunpack.c.h.b16 %v183
    %v289 = vunpack.c.l.b16 %v184
    %v290 = vunpack.c.h.b16 %v184
    %v291 = vunpack.c.l.b16 %v185
    %v292 = vunpack.c.h.b16 %v185
    %v293 = vunpack.c.l.b16 %v186
    %v294 = vunpack.c.h.b16 %v186
    %v295 = vpack.c.b16 %v233, %v231
    %v296 = vpack.c.b16 %v234, %v232
    %v297 = vpack.c.b16 %v237, %v235
    %v298 = vpack.c.b16 %v238, %v236
    %v299 = vpack.c.b16 %v241, %v239
    %v300 = vpack.c.b16 %v242, %v240
    %v301 = vpack.c.b16 %v245, %v243
    %v302 = vpack.c.b16 %v246, %v244
    %v303 = vpack.c.b16 %v249, %v247
    %v304 = vpack.c.b16 %v250, %v248
    %v305 = vpack.c.b16 %v253, %v251
    %v306 = vpack.c.b16 %v254, %v252
    %v307 = vpack.c.b16 %v257, %v255
    %v308 = vpack.c.b16 %v258, %v256
    %v309 = vpack.c.b16 %v261, %v259
    %v310 = vpack.c.b16 %v262, %v260
    %v311 = vpack.c.b16 %v265, %v263
    %v312 = vpack.c.b16 %v266, %v264
    %v313 = vpack.c.b16 %v269, %v267
    %v314 = vpack.c.b16 %v270, %v268
    %v315 = vpack.c.b16 %v273, %v271
    %v316 = vpack.c.b16 %v274, %v272
    %v317 = vpack.c.b16 %v277, %v275
    %v318 = vpack.c.b16 %v278, %v276
    %v319 = vpack.c.b16 %v281, %v279
    %v320 = vpack.c.b16 %v282, %v280
    %v321 = vpack.c.b16 %v285, %v283
    %v322 = vpack.c.b16 %v286, %v284
    %v323 = vpack.c.b16 %v289, %v287
    %v324 = vpack.c.b16 %v290, %v288
    %v325 = vpack.c.b16 %v293, %v291
    %v326 = vpack.c.b16 %v294, %v292
    %359 = vmatprep.subr.bf16.mxu0 %v296
    %360 = vmatpush1.bf16.msra.mxu0 %v295
    %361 = vmatprep.subr.bf16.mxu0 %v298
    %362 = vmatpush1.bf16.msra.mxu0 %v297
    %363 = vmatprep.subr.bf16.mxu0 %v300
    %364 = vmatpush1.bf16.msra.mxu0 %v299
    %365 = vmatprep.subr.bf16.mxu0 %v302
    %366 = vmatpush1.bf16.msra.mxu0 %v301
    %367 = vmatprep.subr.bf16.mxu0 %v304
    %368 = vmatpush1.bf16.msra.mxu0 %v303
    %369 = vmatprep.subr.bf16.mxu0 %v306
    %370 = vmatpush1.bf16.msra.mxu0 %v305
    %371 = vmatprep.subr.bf16.mxu0 %v308
    %372 = vmatpush1.bf16.msra.mxu0 %v307
    %373 = vmatprep.subr.bf16.mxu0 %v310
    %374 = vmatpush1.bf16.msra.mxu0 %v309
    %375 = vmatprep.subr.bf16.mxu0 %v312
    %376 = vmatpush1.bf16.msra.mxu0 %v311
    %377 = vmatprep.subr.bf16.mxu0 %v314
    %378 = vmatpush1.bf16.msra.mxu0 %v313
    %379 = vmatprep.subr.bf16.mxu0 %v316
    %380 = vmatpush1.bf16.msra.mxu0 %v315
    %381 = vmatprep.subr.bf16.mxu0 %v318
    %382 = vmatpush1.bf16.msra.mxu0 %v317
    %383 = vmatprep.subr.bf16.mxu0 %v320
    %384 = vmatpush1.bf16.msra.mxu0 %v319
    %385 = vmatprep.subr.bf16.mxu0 %v322
    %386 = vmatpush1.bf16.msra.mxu0 %v321
    %387 = vmatprep.subr.bf16.mxu0 %v324
    %388 = vmatpush1.bf16.msra.mxu0 %v323
    %389 = vmatprep.subr.bf16.mxu0 %v326
    %390 = vmatpush1.bf16.msra.mxu0 %v325
    %391 = vmatprep.mubr.bf16.mxu0 %v154
    %392 = vmatmul.mubr.bf16.gmra.mrb[0].mxu0 %v153
    %v393 = vpop.f32.mrb[0].mxu0
    %v394 = vadd.f32 %v192, %v393
    %v395 = vpop.f32.mrb[0].mxu0
    %v396 = vadd.f32 %v196, %v395
    %v397 = vpop.f32.mrb[0].mxu0
    %v398 = vadd.f32 %v192, %v397
    %v399 = vpop.f32.mrb[0].mxu0
    %v400 = vadd.f32 %v196, %v399
    %401 = vdwg.mxu0
    %v402 = vmax.f32 %v394, 0.0
    %v403 = vmax.f32 %v396, 0.0
    %v404 = vmax.f32 %v398, 0.0
    %v405 = vmax.f32 %v400, 0.0
    %v406 = vpack.c.bf16 %v404, %v402
    %v407 = vpack.c.bf16 %v405, %v403
    %v408 = vld [vmem:[#allocation5] sm:$0xf]
    %v409 = vld [vmem:[#allocation5 + $0x4] sm:$0xf]
    %v410 = vld [vmem:[#allocation5 + $0x8] sm:$0xf]
    %v411 = vld [vmem:[#allocation5 + $0xc] sm:$0xf]
    %v412 = vld [vmem:[#allocation5 + $0x10] sm:$0xf]
    %v413 = vld [vmem:[#allocation5 + $0x14] sm:$0xf]
    %v414 = vld [vmem:[#allocation5 + $0x18] sm:$0xf]
    %v415 = vld [vmem:[#allocation5 + $0x1c] sm:$0xf]
    %v416 = vld [vmem:[#allocation5 + $0x20] sm:$0xf]
    %v417 = vld [vmem:[#allocation5 + $0x24] sm:$0xf]
    %v418 = vld [vmem:[#allocation5 + $0x28] sm:$0xf]
    %v419 = vld [vmem:[#allocation5 + $0x2c] sm:$0xf]
    %v420 = vld [vmem:[#allocation5 + $0x30] sm:$0xf]
    %v421 = vld [vmem:[#allocation5 + $0x34] sm:$0xf]
    %v422 = vld [vmem:[#allocation5 + $0x38] sm:$0xf]
    %v423 = vld [vmem:[#allocation5 + $0x3c] sm:$0xf]
    %v424 = vld [vmem:[#allocation5 + $0x40] sm:$0xf]
    %v425 = vld [vmem:[#allocation5 + $0x44] sm:$0xf]
    %v426 = vld [vmem:[#allocation5 + $0x48] sm:$0xf]
    %v427 = vld [vmem:[#allocation5 + $0x4c] sm:$0xf]
    %v428 = vld [vmem:[#allocation5 + $0x50] sm:$0xf]
    %v429 = vld [vmem:[#allocation5 + $0x54] sm:$0xf]
    %v430 = vld [vmem:[#allocation5 + $0x58] sm:$0xf]
    %v431 = vld [vmem:[#allocation5 + $0x5c] sm:$0xf]
    %v432 = vld [vmem:[#allocation5 + $0x60] sm:$0xf]
    %v433 = vld [vmem:[#allocation5 + $0x64] sm:$0xf]
    %v434 = vld [vmem:[#allocation5 + $0x68] sm:$0xf]
    %v435 = vld [vmem:[#allocation5 + $0x6c] sm:$0xf]
    %v436 = vld [vmem:[#allocation5 + $0x70] sm:$0xf]
    %v437 = vld [vmem:[#allocation5 + $0x74] sm:$0xf]
    %v438 = vld [vmem:[#allocation5 + $0x78] sm:$0xf]
    %v439 = vld [vmem:[#allocation5 + $0x7c] sm:$0xf]
    %v440 = vld [vmem:[%s6] sm:$0x1]
    %v442 = vlaneseq
    %v443 = vshrl.u32 %v442, 7
    %v444 = vsub.s32 0, %v443
    %v445 = vrot.slane %v440, %v444
    %v479 = vunpack.c.l.b16 %v408
    %v480 = vunpack.c.l.b16 %v409
    %v481 = vunpack.c.l.b16 %v410
    %v482 = vunpack.c.l.b16 %v411
    %v483 = vunpack.c.l.b16 %v412
    %v484 = vunpack.c.l.b16 %v413
    %v485 = vunpack.c.l.b16 %v414
    %v486 = vunpack.c.l.b16 %v415
    %v487 = vunpack.c.l.b16 %v416
    %v488 = vunpack.c.l.b16 %v417
    %v489 = vunpack.c.l.b16 %v418
    %v490 = vunpack.c.l.b16 %v419
    %v491 = vunpack.c.l.b16 %v420
    %v492 = vunpack.c.l.b16 %v421
    %v493 = vunpack.c.l.b16 %v422
    %v494 = vunpack.c.l.b16 %v423
    %v495 = vunpack.c.l.b16 %v424
    %v496 = vunpack.c.l.b16 %v425
    %v497 = vunpack.c.l.b16 %v426
    %v498 = vunpack.c.l.b16 %v427
    %v499 = vunpack.c.l.b16 %v428
    %v500 = vunpack.c.l.b16 %v429
    %v501 = vunpack.c.l.b16 %v430
    %v502 = vunpack.c.l.b16 %v431
    %v503 = vunpack.c.l.b16 %v432
    %v504 = vunpack.c.l.b16 %v433
    %v505 = vunpack.c.l.b16 %v434
    %v506 = vunpack.c.l.b16 %v435
    %v507 = vunpack.c.l.b16 %v436
    %v508 = vunpack.c.l.b16 %v437
    %v509 = vunpack.c.l.b16 %v438
    %v510 = vunpack.c.l.b16 %v439
    %v511 = vpack.c.b16 %v480, %v479
    %v512 = vpack.c.b16 %v482, %v481
    %v513 = vpack.c.b16 %v484, %v483
    %v514 = vpack.c.b16 %v486, %v485
    %v515 = vpack.c.b16 %v488, %v487
    %v516 = vpack.c.b16 %v490, %v489
    %v517 = vpack.c.b16 %v492, %v491
    %v518 = vpack.c.b16 %v494, %v493
    %v519 = vpack.c.b16 %v496, %v495
    %v520 = vpack.c.b16 %v498, %v497
    %v521 = vpack.c.b16 %v500, %v499
    %v522 = vpack.c.b16 %v502, %v501
    %v523 = vpack.c.b16 %v504, %v503
    %v524 = vpack.c.b16 %v506, %v505
    %v525 = vpack.c.b16 %v508, %v507
    %v526 = vpack.c.b16 %v510, %v509
    %543 = vmatprep.subr.bf16.mxu0 0
    %544 = vmatpush1.bf16.msra.mxu0 %v511
    %545 = vmatprep.subr.bf16.mxu0 0
    %546 = vmatpush1.bf16.msra.mxu0 %v512
    %547 = vmatprep.subr.bf16.mxu0 0
    %548 = vmatpush1.bf16.msra.mxu0 %v513
    %549 = vmatprep.subr.bf16.mxu0 0
    %550 = vmatpush1.bf16.msra.mxu0 %v514
    %551 = vmatprep.subr.bf16.mxu0 0
    %552 = vmatpush1.bf16.msra.mxu0 %v515
    %553 = vmatprep.subr.bf16.mxu0 0
    %554 = vmatpush1.bf16.msra.mxu0 %v516
    %555 = vmatprep.subr.bf16.mxu0 0
    %556 = vmatpush1.bf16.msra.mxu0 %v517
    %557 = vmatprep.subr.bf16.mxu0 0
    %558 = vmatpush1.bf16.msra.mxu0 %v518
    %559 = vmatprep.subr.bf16.mxu0 0
    %560 = vmatpush1.bf16.msra.mxu0 %v519
    %561 = vmatprep.subr.bf16.mxu0 0
    %562 = vmatpush1.bf16.msra.mxu0 %v520
    %563 = vmatprep.subr.bf16.mxu0 0
    %564 = vmatpush1.bf16.msra.mxu0 %v521
    %565 = vmatprep.subr.bf16.mxu0 0
    %566 = vmatpush1.bf16.msra.mxu0 %v522
    %567 = vmatprep.subr.bf16.mxu0 0
    %568 = vmatpush1.bf16.msra.mxu0 %v523
    %569 = vmatprep.subr.bf16.mxu0 0
    %570 = vmatpush1.bf16.msra.mxu0 %v524
    %571 = vmatprep.subr.bf16.mxu0 0
    %572 = vmatpush1.bf16.msra.mxu0 %v525
    %573 = vmatprep.subr.bf16.mxu0 0
    %574 = vmatpush1.bf16.msra.mxu0 %v526
    %575 = vmatprep.mubr.bf16.mxu0 %v407
    %576 = vmatmul.mubr.bf16.gmra.mrb[0].mxu0 %v406
    %v577 = vpop.f32.mrb[0].mxu0
    %v578 = vadd.f32 %v445, %v577
    %v579 = vpop.f32.mrb[0].mxu0
    %v580 = vpop.f32.mrb[0].mxu0
    %v581 = vadd.f32 %v445, %v580
    %v582 = vpop.f32.mrb[0].mxu0
    %583 = vdwg.mxu0
    %v584 = vmax.f32 %v578, 0.0
    %v585 = vmax.f32 %v581, 0.0
    %v586 = vpack.c.bf16 %v585, %v584
    %v587 = vld [vmem:[#allocation7] sm:$0xf]
    %v588 = vld [vmem:[#allocation7 + $0x4] sm:$0xf]
    %v589 = vld [vmem:[#allocation7 + $0x8] sm:$0xf]
    %v590 = vld [vmem:[#allocation7 + $0xc] sm:$0xf]
    %v591 = vld [vmem:[#allocation7 + $0x10] sm:$0xf]
    %v592 = vld [vmem:[#allocation7 + $0x14] sm:$0xf]
    %v593 = vld [vmem:[#allocation7 + $0x18] sm:$0xf]
    %v594 = vld [vmem:[#allocation7 + $0x1c] sm:$0xf]
    %v595 = vld [vmem:[#allocation7 + $0x20] sm:$0xf]
    %v596 = vld [vmem:[#allocation7 + $0x24] sm:$0xf]
    %v597 = vld [vmem:[#allocation7 + $0x28] sm:$0xf]
    %v598 = vld [vmem:[#allocation7 + $0x2c] sm:$0xf]
    %v599 = vld [vmem:[#allocation7 + $0x30] sm:$0xf]
    %v600 = vld [vmem:[#allocation7 + $0x34] sm:$0xf]
    %v601 = vld [vmem:[#allocation7 + $0x38] sm:$0xf]
    %v602 = vld [vmem:[#allocation7 + $0x3c] sm:$0xf]
    %v603 = vld [vmem:[%s8] sm:$0x1]
    %v605 = vlaneseq
    %v606 = vshrl.u32 %v605, 7
    %v607 = vsub.s32 0, %v606
    %v608 = vrot.slane %v603, %v607
    %v626 = vunpack.c.l.b16 %v587
    %v627 = vunpack.c.l.b16 %v588
    %v628 = vunpack.c.l.b16 %v589
    %v629 = vunpack.c.l.b16 %v590
    %v630 = vunpack.c.l.b16 %v591
    %v631 = vunpack.c.l.b16 %v592
    %v632 = vunpack.c.l.b16 %v593
    %v633 = vunpack.c.l.b16 %v594
    %v634 = vunpack.c.l.b16 %v595
    %v635 = vunpack.c.l.b16 %v596
    %v636 = vunpack.c.l.b16 %v597
    %v637 = vunpack.c.l.b16 %v598
    %v638 = vunpack.c.l.b16 %v599
    %v639 = vunpack.c.l.b16 %v600
    %v640 = vunpack.c.l.b16 %v601
    %v641 = vunpack.c.l.b16 %v602
    %v642 = vpack.c.b16 %v627, %v626
    %v643 = vpack.c.b16 %v629, %v628
    %v644 = vpack.c.b16 %v631, %v630
    %v645 = vpack.c.b16 %v633, %v632
    %v646 = vpack.c.b16 %v635, %v634
    %v647 = vpack.c.b16 %v637, %v636
    %v648 = vpack.c.b16 %v639, %v638
    %v649 = vpack.c.b16 %v641, %v640
    %658 = vmatprep.subr.bf16.mxu0 0
    %659 = vmatpush1.bf16.msra.mxu0 %v642
    %660 = vmatprep.subr.bf16.mxu0 0
    %661 = vmatpush1.bf16.msra.mxu0 %v643
    %662 = vmatprep.subr.bf16.mxu0 0
    %663 = vmatpush1.bf16.msra.mxu0 %v644
    %664 = vmatprep.subr.bf16.mxu0 0
    %665 = vmatpush1.bf16.msra.mxu0 %v645
    %666 = vmatprep.subr.bf16.mxu0 0
    %667 = vmatpush1.bf16.msra.mxu0 %v646
    %668 = vmatprep.subr.bf16.mxu0 0
    %669 = vmatpush1.bf16.msra.mxu0 %v647
    %670 = vmatprep.subr.bf16.mxu0 0
    %671 = vmatpush1.bf16.msra.mxu0 %v648
    %672 = vmatprep.subr.bf16.mxu0 0
    %673 = vmatpush1.bf16.msra.mxu0 %v649
    %674 = vmatprep.subr.bf16.mxu0 0
    %675 = vmatpush1.bf16.msra.mxu0 0
    %676 = vmatprep.subr.bf16.mxu0 0
    %677 = vmatpush1.bf16.msra.mxu0 0
    %678 = vmatprep.subr.bf16.mxu0 0
    %679 = vmatpush1.bf16.msra.mxu0 0
    %680 = vmatprep.subr.bf16.mxu0 0
    %681 = vmatpush1.bf16.msra.mxu0 0
    %682 = vmatprep.subr.bf16.mxu0 0
    %683 = vmatpush1.bf16.msra.mxu0 0
    %684 = vmatprep.subr.bf16.mxu0 0
    %685 = vmatpush1.bf16.msra.mxu0 0
    %686 = vmatprep.subr.bf16.mxu0 0
    %687 = vmatpush1.bf16.msra.mxu0 0
    %688 = vmatprep.subr.bf16.mxu0 0
    %689 = vmatpush1.bf16.msra.mxu0 0
    %690 = vmatprep.mubr.bf16.mxu0 0
    %691 = vmatmul.mubr.bf16.gmra.mrb[0].mxu0 %v586
    %v692 = vpop.f32.mrb[0].mxu0
    %v693 = vadd.f32 %v608, %v692
    %v694 = vpop.f32.mrb[0].mxu0
    %v695 = vpop.f32.mrb[0].mxu0
    %v696 = vadd.f32 %v608, %v695
    %v697 = vpop.f32.mrb[0].mxu0
    %698 = vdwg.mxu0
    %699 = vst [vmem:[#allocation8] sm:$0xff] %v693
    %700 = vst [vmem:[#allocation8 + $0x8] sm:$0xff] %v696
    // Predicated region
    $region50: #{dqn_forward_padded.1} parent=1 // pred_check
      _
    $region51: #{dqn_forward_padded.1} parent=1 // pred_check_branch
      %702 = sbr.rel (0) target = $region53
    $region52: #{dqn_forward_padded.1} parent=1 // pred_region
      %s704 = ssub.s32 256, 256
      %705 = vsyncadd [#allocation4], %s704
      %s706 = sshll.u32 [#allocation8], 4
      %s707 = int_to_ptr.vmem [resolvable:$true] %s706
      %712 = dma.vmem_to_hbm [thread:$0]  %s707, 256, %s9, [#allocation4], 128, 128, 8
    $region53: #{dqn_forward_padded.1} parent=1 // pred_fallthru
      _
    // Predicated region
    $region54: #{dqn_forward_padded.1} parent=1 // pred_check
      _
    $region55: #{dqn_forward_padded.1} parent=1 // pred_check_branch
      %714 = sbr.rel (0) target = $region57
    $region56: #{dqn_forward_padded.1} parent=1 // pred_region
      %715 = dma.done [#allocation4], 256
    $region57: #{dqn_forward_padded.1} parent=1 // pred_fallthru
      _
    %716 = vsyncpa [#allocation3], 1
    %717 = vsyncpa [#allocation6], 1
    %718 = vsyncpa [#allocation4], 1

</llo_original>
